<compile_context>
chip_gen: v7x
topology: tpu7x:2x2x1
jax: 0.10.0
libtpu: 0.0.40
codegen_flags: <defaults>
</compile_context>

<pallas_src>
import jax
import jax.numpy as jnp
import numpy as np
from jax.experimental import pallas as pl
from jax.experimental.pallas import tpu as pltpu

GRID = 32                   # reference uses 224; small test size here
G2 = GRID * GRID
SOFT_COEFFICIENT = 1.0      # args.soft_coefficient
NEG_BIG = -10000000000.0    # -1e10, as in the reference


def actor_kernel(p_ref, x5_ref, probs_ref, cnn_ref):
    """One batch tile.

    p_ref   : (7,) f32 in SMEM: [a0, a1, a2, a3, a4, ab, thresh]
              merged = sum_c a_c * ch_c + ab   (cnn/coarse/merge folded)
              thresh = global min(net_img) + soft_coefficient (precomputed).
    x5_ref  : (5, TB, G2) f32 VMEM, channel-major observation tile.
    probs_ref, cnn_ref : (TB, G2) f32 VMEM outputs.
    """
    ch0 = x5_ref[0]                      # x[:, 1        : 1+G2   ]
    ch1 = x5_ref[1]                      # net image
    ch2 = x5_ref[2]                      # mask
    ch3 = x5_ref[3]
    ch4 = x5_ref[4]

    # cnn(4->1) + cnn_coarse(3->1) + merge(2->1) folded into one affine combo.
    merged = (p_ref[0] * ch0 + p_ref[1] * ch1 + p_ref[2] * ch2 +
              p_ref[3] * ch3 + p_ref[4] * ch4 + p_ref[5])      # (TB, G2)
    cnn_ref[...] = merged

    # torch: mask2 = not(net_img <= min+coef); where(mask + mask2 >= 1, -1e10, x)
    # With the (nonnegative) occupancy mask ch2 this is the boolean predicate:
    net_img = ch1 + ch2 * 10.0
    masked = (net_img > p_ref[6]) | (ch2 >= 1.0)
    logits = jnp.where(masked, jnp.float32(NEG_BIG), merged)

    # row softmax (f32; torch upcasts to f64 — no f64 on TPU)
    m = jnp.max(logits, axis=-1, keepdims=True)
    e = jnp.exp(logits - m)
    s = jnp.sum(e, axis=-1, keepdims=True)
    probs_ref[...] = e * pl.reciprocal(s)        # one exact reciprocal per row


def _fold_params(p):
    """Fold cnn(4->1), cnn_coarse(3->1), merge(2->1) 1x1 convs into one affine.

    raw layout: [w_cnn(4), b_cnn, w_coarse(3), b_coarse, w_merge(2), b_merge]
    """
    wm0, wm1, bm = p[9], p[10], p[11]
    a0 = wm1 * p[5]
    a1 = wm0 * p[0] + wm1 * p[6]
    a2 = wm0 * p[1]
    a3 = wm0 * p[2] + wm1 * p[7]
    a4 = wm0 * p[3]
    ab = wm0 * p[4] + wm1 * p[8] + bm
    return jnp.stack([a0, a1, a2, a3, a4, ab])


def actor_forward(x, raw_params, *, batch_tile=None):
    """x: (B, 1 + 5*G*G) f32 flat observation.  Returns (probs, cnn_res, gcn_res)."""
    B = x.shape[0]
    if batch_tile is None:
        # 8 rows/tile keeps double-buffered tiles well under v7x's 64 MiB VMEM
        # even at grid=224; raise on v5e/v6e (128 MiB) if desired.
        batch_tile = B if B <= 8 else 8
    TB = batch_tile
    assert TB == B or TB % 8 == 0, "batch tile must equal B or be a multiple of 8"

    # Channel-major layout (5, B, G2): batch on sublanes, spatial on lanes.
    # TODO(synk): the offset-1 slice from the flat obs forces one XLA copy;
    # emit the observation channel-major upstream to drop this HBM pass.
    x5 = jnp.transpose(x[:, 1:1 + 5 * G2].reshape(B, 5, G2), (1, 0, 2))

    # torch: net_img_min = net_img.min() + soft_coefficient (batch-GLOBAL min).
    # Computed here (fuses with the layout transform under jit) so the kernel
    # result is independent of the batch tiling.
    net_img = x5[1] + x5[2] * 10.0
    thresh = jnp.min(net_img) + jnp.float32(SOFT_COEFFICIENT)

    params = jnp.concatenate([_fold_params(raw_params), thresh[None]]).astype(jnp.float32)

    probs, cnn_flat = pl.pallas_call(
        actor_kernel,
        out_shape=(
            jax.ShapeDtypeStruct((B, G2), jnp.float32),
            jax.ShapeDtypeStruct((B, G2), jnp.float32),
        ),
        grid=(pl.cdiv(B, TB),),
        in_specs=[
            pl.BlockSpec(memory_space=pltpu.MemorySpace.SMEM),        # folded scalars
            pl.BlockSpec((5, TB, G2), lambda i: (0, i, 0)),           # obs, channel-major
        ],
        out_specs=(
            pl.BlockSpec((TB, G2), lambda i: (i, 0)),                 # probs
            pl.BlockSpec((TB, G2), lambda i: (i, 0)),                 # merged (cnn_res)
        ),
        compiler_params=pltpu.CompilerParams(
            dimension_semantics=("parallel",),    # shard batch tiles over v7x's 2 TCs
        ),
    )(params, x5)

    cnn_res = cnn_flat.reshape(B, 1, GRID, GRID)   # NCHW, matching torch's cnn_res
    return probs, cnn_res, None


def actor_forward_ref(x, p):
    """Pure-JAX reference with the ORIGINAL (unfolded) math, for correctness."""
    B = x.shape[0]
    x5 = x[:, 1:1 + 5 * G2].reshape(B, 5, G2)
    ch0, ch1, ch2, ch3, ch4 = (x5[:, i, :] for i in range(5))
    cnn_out = p[0] * ch1 + p[1] * ch2 + p[2] * ch3 + p[3] * ch4 + p[4]
    coarse_out = p[5] * ch0 + p[6] * ch1 + p[7] * ch3 + p[8]
    merged = p[9] * cnn_out + p[10] * coarse_out + p[11]
    net_img = ch1 + ch2 * 10.0
    net_img_min = jnp.min(net_img) + SOFT_COEFFICIENT
    mask2 = jnp.logical_not(net_img <= net_img_min).astype(jnp.float32)
    logits = jnp.where(ch2 + mask2 >= 1.0, jnp.float32(NEG_BIG), merged)
    return jax.nn.softmax(logits, axis=-1), merged.reshape(B, 1, GRID, GRID)


if __name__ == "__main__":
    key = jax.random.PRNGKey(0)
    k_x, k_p = jax.random.split(key)

    B = 16   # small, but enough for a 2-step batch grid (TB = 8) to exercise pipelining
    x = jax.random.uniform(k_x, (B, 1 + 5 * G2), dtype=jnp.float32)

    # deterministic "weights": [w_cnn(4), b_cnn, w_coarse(3), b_coarse, w_merge(2), b_merge]
    params = 0.1 * jax.random.normal(k_p, (12,), dtype=jnp.float32)

    probs, cnn_res, gcn_res = actor_forward(x, params)
    probs = jax.block_until_ready(probs)
    cnn_res = jax.block_until_ready(cnn_res)

    # sanity check against the pure-JAX (unfolded) reference
    probs_ref, cnn_ref = actor_forward_ref(x, params)
    assert probs.shape == (B, G2) and cnn_res.shape == (B, 1, GRID, GRID)
    np.testing.assert_allclose(np.asarray(cnn_res), np.asarray(cnn_ref), rtol=2e-5, atol=1e-6)
    np.testing.assert_allclose(np.asarray(probs), np.asarray(probs_ref), rtol=2e-5, atol=1e-7)
    np.testing.assert_allclose(np.asarray(probs).sum(axis=-1), np.ones(B), rtol=1e-5)

    print("KERNEL_OK")
</pallas_src>

<mosaic_0001>
module attributes {stable_mosaic.version = 11 : i64} {
  func.func @actor_kernel(%arg0: i32, %arg1: memref<7xf32, #tpu.memory_space<smem>>, %arg2: memref<5x8x1024xf32, #tpu.memory_space<vmem>>, %arg3: memref<8x1024xf32, #tpu.memory_space<vmem>>, %arg4: memref<8x1024xf32, #tpu.memory_space<vmem>>) attributes {dimension_semantics = [#tpu.dimension_semantics<parallel>], iteration_bounds = array<i64: 2>, scalar_prefetch = 0 : i64, scratch_operands = 0 : i64, tpu.core_type = #tpu.core_type<tc>, window_params = [{transform_indices = @transform_0, window_bounds = array<i64: 7>}, {transform_indices = @transform_1, window_bounds = array<i64: 5, 8, 1024>}, {transform_indices = @transform_2, window_bounds = array<i64: 8, 1024>}, {transform_indices = @transform_3, window_bounds = array<i64: 8, 1024>}]} {
    %c0 = arith.constant 0 : index
    %c0_0 = arith.constant 0 : index
    %c0_1 = arith.constant 0 : index
    %0 = vector.load %arg2[%c0, %c0_0, %c0_1] : memref<5x8x1024xf32, #tpu.memory_space<vmem>>, vector<1x8x1024xf32>
    %1 = vector.shape_cast %0 : vector<1x8x1024xf32> to vector<8x1024xf32>
    %c1 = arith.constant 1 : index
    %c0_2 = arith.constant 0 : index
    %c0_3 = arith.constant 0 : index
    %2 = vector.load %arg2[%c1, %c0_2, %c0_3] : memref<5x8x1024xf32, #tpu.memory_space<vmem>>, vector<1x8x1024xf32>
    %3 = vector.shape_cast %2 : vector<1x8x1024xf32> to vector<8x1024xf32>
    %c2 = arith.constant 2 : index
    %c0_4 = arith.constant 0 : index
    %c0_5 = arith.constant 0 : index
    %4 = vector.load %arg2[%c2, %c0_4, %c0_5] : memref<5x8x1024xf32, #tpu.memory_space<vmem>>, vector<1x8x1024xf32>
    %5 = vector.shape_cast %4 : vector<1x8x1024xf32> to vector<8x1024xf32>
    %c3 = arith.constant 3 : index
    %c0_6 = arith.constant 0 : index
    %c0_7 = arith.constant 0 : index
    %6 = vector.load %arg2[%c3, %c0_6, %c0_7] : memref<5x8x1024xf32, #tpu.memory_space<vmem>>, vector<1x8x1024xf32>
    %7 = vector.shape_cast %6 : vector<1x8x1024xf32> to vector<8x1024xf32>
    %c4 = arith.constant 4 : index
    %c0_8 = arith.constant 0 : index
    %c0_9 = arith.constant 0 : index
    %8 = vector.load %arg2[%c4, %c0_8, %c0_9] : memref<5x8x1024xf32, #tpu.memory_space<vmem>>, vector<1x8x1024xf32>
    %9 = vector.shape_cast %8 : vector<1x8x1024xf32> to vector<8x1024xf32>
    %c0_10 = arith.constant 0 : index
    %10 = memref.load %arg1[%c0_10] : memref<7xf32, #tpu.memory_space<smem>>
    %11 = vector.broadcast %10 : f32 to vector<8x1024xf32>
    %12 = arith.mulf %11, %1 : vector<8x1024xf32>
    %c1_11 = arith.constant 1 : index
    %13 = memref.load %arg1[%c1_11] : memref<7xf32, #tpu.memory_space<smem>>
    %14 = vector.broadcast %13 : f32 to vector<8x1024xf32>
    %15 = arith.mulf %14, %3 : vector<8x1024xf32>
    %16 = arith.addf %12, %15 : vector<8x1024xf32>
    %c2_12 = arith.constant 2 : index
    %17 = memref.load %arg1[%c2_12] : memref<7xf32, #tpu.memory_space<smem>>
    %18 = vector.broadcast %17 : f32 to vector<8x1024xf32>
    %19 = arith.mulf %18, %5 : vector<8x1024xf32>
    %20 = arith.addf %16, %19 : vector<8x1024xf32>
    %c3_13 = arith.constant 3 : index
    %21 = memref.load %arg1[%c3_13] : memref<7xf32, #tpu.memory_space<smem>>
    %22 = vector.broadcast %21 : f32 to vector<8x1024xf32>
    %23 = arith.mulf %22, %7 : vector<8x1024xf32>
    %24 = arith.addf %20, %23 : vector<8x1024xf32>
    %c4_14 = arith.constant 4 : index
    %25 = memref.load %arg1[%c4_14] : memref<7xf32, #tpu.memory_space<smem>>
    %26 = vector.broadcast %25 : f32 to vector<8x1024xf32>
    %27 = arith.mulf %26, %9 : vector<8x1024xf32>
    %28 = arith.addf %24, %27 : vector<8x1024xf32>
    %c5 = arith.constant 5 : index
    %29 = memref.load %arg1[%c5] : memref<7xf32, #tpu.memory_space<smem>>
    %30 = vector.broadcast %29 : f32 to vector<8x1024xf32>
    %31 = arith.addf %28, %30 : vector<8x1024xf32>
    %c0_15 = arith.constant 0 : index
    %c0_16 = arith.constant 0 : index
    %32 = vector.load %arg4[%c0_15, %c0_16] : memref<8x1024xf32, #tpu.memory_space<vmem>>, vector<8x1024xf32>
    tpu.vector_store %arg4[%c0_15, %c0_16], %31 {strides = array<i32>} : memref<8x1024xf32, #tpu.memory_space<vmem>>, vector<8x1024xf32>,
    %cst = arith.constant 1.000000e+01 : f32
    %33 = vector.broadcast %cst : f32 to vector<8x1024xf32>
    %34 = arith.mulf %5, %33 : vector<8x1024xf32>
    %35 = arith.addf %3, %34 : vector<8x1024xf32>
    %c6 = arith.constant 6 : index
    %36 = memref.load %arg1[%c6] : memref<7xf32, #tpu.memory_space<smem>>
    %37 = vector.broadcast %36 : f32 to vector<8x1024xf32>
    %38 = arith.cmpf ogt, %35, %37 : vector<8x1024xf32>
    %cst_17 = arith.constant 1.000000e+00 : f32
    %39 = vector.broadcast %cst_17 : f32 to vector<8x1024xf32>
    %40 = arith.cmpf oge, %5, %39 : vector<8x1024xf32>
    %41 = arith.ori %38, %40 : vector<8x1024xi1>
    %cst_18 = arith.constant -1.000000e+10 : f32
    %42 = vector.broadcast %cst_18 : f32 to vector<8x1024xf32>
    %43 = arith.select %41, %42, %31 : vector<8x1024xi1>, vector<8x1024xf32>
    %cst_19 = arith.constant dense<0xFF800000> : vector<8xf32>
    %44 = vector.multi_reduction <maximumf>, %43, %cst_19 [1] : vector<8x1024xf32> to vector<8xf32>
    %45 = vector.shape_cast %44 : vector<8xf32> to vector<8x1xf32>
    %46 = vector.broadcast %45 : vector<8x1xf32> to vector<8x1024xf32>
    %47 = arith.subf %43, %46 : vector<8x1024xf32>
    %48 = math.exp %47 : vector<8x1024xf32>
    %cst_20 = arith.constant dense<0.000000e+00> : vector<8xf32>
    %49 = vector.multi_reduction <add>, %48, %cst_20 [1] : vector<8x1024xf32> to vector<8xf32>
    %50 = vector.shape_cast %49 : vector<8xf32> to vector<8x1xf32>
    %51 = tpu.reciprocal %50 : vector<8x1xf32> -> vector<8x1xf32>
    %52 = vector.broadcast %51 : vector<8x1xf32> to vector<8x1024xf32>
    %53 = arith.mulf %48, %52 : vector<8x1024xf32>
    %c0_21 = arith.constant 0 : index
    %c0_22 = arith.constant 0 : index
    %54 = vector.load %arg3[%c0_21, %c0_22] : memref<8x1024xf32, #tpu.memory_space<vmem>>, vector<8x1024xf32>
    tpu.vector_store %arg3[%c0_21, %c0_22], %53 {strides = array<i32>} : memref<8x1024xf32, #tpu.memory_space<vmem>>, vector<8x1024xf32>,
    return
  }
  func.func @transform_0(%arg0: i32) -> i32 {
    %c0_i32 = arith.constant 0 : i32
    %c0_i32_0 = arith.constant 0 : i32
    return %c0_i32 : i32
  }
  func.func @transform_1(%arg0: i32) -> (i32, i32, i32) {
    %c0_i32 = arith.constant 0 : i32
    %c0_i32_0 = arith.constant 0 : i32
    %c0_i32_1 = arith.constant 0 : i32
    return %c0_i32, %arg0, %c0_i32_0 : i32, i32, i32
  }
  func.func @transform_2(%arg0: i32) -> (i32, i32) {
    %c0_i32 = arith.constant 0 : i32
    %c0_i32_0 = arith.constant 0 : i32
    return %arg0, %c0_i32 : i32, i32
  }
  func.func @transform_3(%arg0: i32) -> (i32, i32) {
    %c0_i32 = arith.constant 0 : i32
    %c0_i32_0 = arith.constant 0 : i32
    return %arg0, %c0_i32 : i32, i32
  }
}

</mosaic_0001>

<llo_original>
// kernel: tpu_custom_call.1
$region0: #{tpu_custom_call.1}
  #allocation0 [shape = 'u32[]', space=smem, size = 0x4, offset = 0x4, fixed_abs, tag = 'smem constant byte address 0x4 - core index']
  #allocation1 [shape = 'u32[144,128]{1,0:T(1,128)}', space=vmem, size = 0x12000, scoped, tag = 'internal scratch']
  %s0 = inlined_call_operand.hbm [shape: f32[7], index: 0, kind: input, shape index: {}]
  %s1 = inlined_call_operand.hbm [shape: f32[5,16,1024], index: 1, kind: input, shape index: {}]
  %s2 = inlined_call_operand.hbm [shape: f32[16,1024], index: 2, kind: output, shape index: {0}]
  %s3 = inlined_call_operand.hbm [shape: f32[16,1024], index: 3, kind: output, shape index: {1}]
  %4 = xla_tuple %s2, %s3
  %s5 = sld [smem:[#allocation0]]
  $region57: #{tpu_custom_call.1} parent=0
    _
  %s7 = ssub.s32 1, %s5
  %s8 = scalar_select 0, %s7, %s5
  $region1: #{tpu_custom_call.1} parent=0
    #allocation2 [shape = 'u8[512]{0}', space=smem, size = 0x200, scoped, tag = 'input window, operand 0, single buffered']
    #allocation3 [shape = 's32[2]{0}', space=sflag, size = 0x8, scoped, tag = 'scoped memory for tpu_custom_call.1']
    #allocation4 [shape = 's32[2]{0}', space=sflag, size = 0x8, scoped, tag = 'scoped memory for tpu_custom_call.1']
    #allocation5 [shape = 's32[2]{0}', space=sflag, size = 0x8, scoped, tag = 'scoped memory for tpu_custom_call.1']
    #allocation6 [shape = 'u8[327680]{0}', space=vmem, size = 0x50000, scoped, tag = 'input window, operand 1']
    #allocation7 [shape = 'u8[65536]{0}', space=vmem, size = 0x10000, scoped, tag = 'output window, operand 0']
    #allocation8 [shape = 'u8[65536]{0}', space=vmem, size = 0x10000, scoped, tag = 'output window, operand 1']
    #allocation9 [shape = 's32[2]{0}', space=sflag, size = 0x8, scoped, tag = 'scoped memory for tpu_custom_call.1']
    %9 = vsyncpa [#allocation5], 0
    %10 = vsyncpa [#allocation3], 0
    %s11 = scalar_lea.sflag [#allocation3], 1
    %12 = vsyncpa %s11, 0
    %13 = vsyncpa [#allocation4], 0
    %s14 = scalar_lea.sflag [#allocation4], 1
    %15 = vsyncpa %s14, 0
    %16 = vsyncpa [#allocation9], 0
    %s17 = scalar_lea.sflag [#allocation9], 1
    %18 = vsyncpa %s17, 0
    loop: start=0, step=1, limit=4
    $region2: #{tpu_custom_call.1} parent=1 // loop_pre_header
      _
    $region3: #{tpu_custom_call.1} parent=1 // loop_header
      %s20 = sphi 0, %s24
      %p21 = scmp.ge.s32.totalorder %s20, 4
      %s28 = sphi 0, %s28
      %s30 = sphi 0, %s28
      %s31 = sphi 0, %s30
      %s45 = sphi 0, %s31
      %s51 = sphi 0, %s53
      %s54 = sphi 0, %s51
      %s55 = sphi 0, %s54
      %s71 = sphi 0, %s55
      %s77 = sphi 0, %s79
      %s80 = sphi 0, %s77
      %s81 = sphi 0, %s80
      %s97 = sphi 0, %s81
      %s103 = sphi 0, %s105
      %s106 = sphi 0, %s103
      %s107 = sphi 0, %s106
      %s123 = sphi 0, %s107
    $region4: #{tpu_custom_call.1} parent=1 // loop_header_branch
      %23 = sbr.rel (%p21) target = $region8
    $region5: #{tpu_custom_call.1} parent=1 // loop_body
      %s25 = ssub.s32 %s20, 1
      %s26 = ssub.s32 %s20, 2
      %s27 = sadd.s32 %s20, 1
      %s29 = sadd.s32 %s28, 1
      %p32 = scmp.eq.s32.totalorder %s20, 1
      %p33 = scmp.ne.s32.totalorder %s28, %s30
      %p34 = scmp.eq.s32.totalorder %s20, 0
      %p35 = por %p33, %p34
      %p36 = scmp.ne.s32.totalorder %s28, %s30
      %p37 = scmp.eq.s32.totalorder %s25, 1
      %p38 = por %p36, %p37
      %p39 = scmp.ne.s32.totalorder %s30, %s31
      %p40 = scmp.eq.s32.totalorder %s25, 0
      %p41 = por %p39, %p40
      %p42 = scmp.ne.s32.totalorder %s30, %s31
      %p43 = scmp.eq.s32.totalorder %s26, 1
      %p44 = por %p42, %p43
      %p46 = scmp.ne.s32.totalorder %s31, %s45
      %p47 = scmp.eq.s32.totalorder %s26, 0
      %p48 = por %p46, %p47
      %s49 = ssub.s32 %s20, %s27
      %p50 = scmp.eq.s32.totalorder %s49, 0
      %s52 = sadd.s32 %s51, 1
      %s53 = scalar_select %p50, %s51, %s52
      %p56 = pneg %p50
      %p57 = scmp.eq.s32.totalorder %s20, 1
      %p58 = por %p56, %p57
      %p59 = scmp.ne.s32.totalorder %s51, %s54
      %p60 = scmp.eq.s32.totalorder %s20, 0
      %p61 = por %p59, %p60
      %p62 = scmp.ne.s32.totalorder %s51, %s54
      %p63 = scmp.eq.s32.totalorder %s25, 1
      %p64 = por %p62, %p63
      %p65 = scmp.ne.s32.totalorder %s54, %s55
      %p66 = scmp.eq.s32.totalorder %s25, 0
      %p67 = por %p65, %p66
      %p68 = scmp.ne.s32.totalorder %s54, %s55
      %p69 = scmp.eq.s32.totalorder %s26, 1
      %p70 = por %p68, %p69
      %p72 = scmp.ne.s32.totalorder %s55, %s71
      %p73 = scmp.eq.s32.totalorder %s26, 0
      %p74 = por %p72, %p73
      %s75 = ssub.s32 %s20, %s27
      %p76 = scmp.eq.s32.totalorder %s75, 0
      %s78 = sadd.s32 %s77, 1
      %s79 = scalar_select %p76, %s77, %s78
      %p82 = pneg %p76
      %p83 = scmp.eq.s32.totalorder %s20, 1
      %p84 = por %p82, %p83
      %p85 = scmp.ne.s32.totalorder %s77, %s80
      %p86 = scmp.eq.s32.totalorder %s20, 0
      %p87 = por %p85, %p86
      %p88 = scmp.ne.s32.totalorder %s77, %s80
      %p89 = scmp.eq.s32.totalorder %s25, 1
      %p90 = por %p88, %p89
      %p91 = scmp.ne.s32.totalorder %s80, %s81
      %p92 = scmp.eq.s32.totalorder %s25, 0
      %p93 = por %p91, %p92
      %p94 = scmp.ne.s32.totalorder %s80, %s81
      %p95 = scmp.eq.s32.totalorder %s26, 1
      %p96 = por %p94, %p95
      %p98 = scmp.ne.s32.totalorder %s81, %s97
      %p99 = scmp.eq.s32.totalorder %s26, 0
      %p100 = por %p98, %p99
      %s101 = ssub.s32 %s20, %s27
      %p102 = scmp.eq.s32.totalorder %s101, 0
      %s104 = sadd.s32 %s103, 1
      %s105 = scalar_select %p102, %s103, %s104
      %p108 = pneg %p102
      %p109 = scmp.eq.s32.totalorder %s20, 1
      %p110 = por %p108, %p109
      %p111 = scmp.ne.s32.totalorder %s103, %s106
      %p112 = scmp.eq.s32.totalorder %s20, 0
      %p113 = por %p111, %p112
      %p114 = scmp.ne.s32.totalorder %s103, %s106
      %p115 = scmp.eq.s32.totalorder %s25, 1
      %p116 = por %p114, %p115
      %p117 = scmp.ne.s32.totalorder %s106, %s107
      %p118 = scmp.eq.s32.totalorder %s25, 0
      %p119 = por %p117, %p118
      %p120 = scmp.ne.s32.totalorder %s106, %s107
      %p121 = scmp.eq.s32.totalorder %s26, 1
      %p122 = por %p120, %p121
      %p124 = scmp.ne.s32.totalorder %s107, %s123
      %p125 = scmp.eq.s32.totalorder %s26, 0
      %p126 = por %p124, %p125
      %p127 = scmp.le.s32.totalorder 1, %s20
      %p128 = scmp.lt.s32.totalorder %s20, 3
      %p129 = pnand %p127, %p128
      %p130 = pneg %p129
      // Predicated region
      $region9: #{tpu_custom_call.1} parent=5 // pred_check
        _
      $region10: #{tpu_custom_call.1} parent=5 // pred_check_branch
        %132 = sbr.rel (%p129) target = $region12
      $region11: #{tpu_custom_call.1} parent=5 // pred_region
        %s133 = ssub.s32 %s20, 1
        // Predicated region
        $region13: #{tpu_custom_call.1} parent=11 // pred_check
          %p134 = pneg %p41
        $region14: #{tpu_custom_call.1} parent=11 // pred_check_branch
          %136 = sbr.rel (%p134) target = $region16
        $region15: #{tpu_custom_call.1} parent=11 // pred_region
          %s138 = ssub.s32 16, 16
          %139 = vsyncadd [#allocation5], %s138
          %142 = dma.hbm_to_smem %s0, 16, [#allocation2], [#allocation5]
        $region16: #{tpu_custom_call.1} parent=11 // pred_fallthru
          _
      $region12: #{tpu_custom_call.1} parent=5 // pred_fallthru
        _
      %p143 = scmp.lt.s32.totalorder %s20, 2
      // Predicated region
      $region17: #{tpu_custom_call.1} parent=5 // pred_check
        %p144 = pneg %p143
      $region18: #{tpu_custom_call.1} parent=5 // pred_check_branch
        %146 = sbr.rel (%p144) target = $region20
      $region19: #{tpu_custom_call.1} parent=5 // pred_region
        // Predicated region
        $region21: #{tpu_custom_call.1} parent=19 // pred_check
          %p147 = pneg %p61
        $region22: #{tpu_custom_call.1} parent=19 // pred_check_branch
          %149 = sbr.rel (%p147) target = $region24
        $region23: #{tpu_custom_call.1} parent=19 // pred_region
          %s150 = sand.u32 %s51, 1
          %s151 = scalar_lea.sflag [#allocation3], %s150
          %s152 = sand.u32 %s51, 1
          %s153 = smul.addr %s152, 320
          %s154 = scalar_lea.vmem [#allocation6], %s153
          %s156 = ssub.s32 5120, 5120
          %157 = vsyncadd %s151, %s156
          %s158 = smul.addr %s20, 8
          %s159 = smul.addr %s158, 128
          %s160 = scalar_lea.hbm %s1, %s159
          %s161 = sshll.u32 %s154, 4
          %s162 = int_to_ptr.vmem [resolvable:$true] %s161
          %167 = dma.hbm_to_vmem [thread:$0]  %s160, 5120, %s162, %s151, 2048, 1024, 64
        $region24: #{tpu_custom_call.1} parent=19 // pred_fallthru
          _
      $region20: #{tpu_custom_call.1} parent=5 // pred_fallthru
        _
      %p168 = scmp.le.s32.totalorder 1, %s20
      %p169 = scmp.lt.s32.totalorder %s20, 3
      %p170 = pnand %p168, %p169
      %p171 = pneg %p170
      // Predicated region
      $region25: #{tpu_custom_call.1} parent=5 // pred_check
        _
      $region26: #{tpu_custom_call.1} parent=5 // pred_check_branch
        %173 = sbr.rel (%p170) target = $region28
      $region27: #{tpu_custom_call.1} parent=5 // pred_region
        %s174 = ssub.s32 %s20, 1
        // Predicated region
        $region29: #{tpu_custom_call.1} parent=27 // pred_check
          %p175 = pneg %p41
        $region30: #{tpu_custom_call.1} parent=27 // pred_check_branch
          %177 = sbr.rel (%p175) target = $region32
        $region31: #{tpu_custom_call.1} parent=27 // pred_region
          %178 = dma.done [#allocation5], 16
        $region32: #{tpu_custom_call.1} parent=27 // pred_fallthru
          _
        %s179 = sand.u32 %s54, 1
        %s180 = scalar_lea.sflag [#allocation3], %s179
        %s181 = sand.u32 %s54, 1
        %s182 = smul.addr %s181, 320
        %s183 = scalar_lea.vmem [#allocation6], %s182
        // Predicated region
        $region33: #{tpu_custom_call.1} parent=27 // pred_check
          %p184 = pneg %p67
        $region34: #{tpu_custom_call.1} parent=27 // pred_check_branch
          %186 = sbr.rel (%p184) target = $region36
        $region35: #{tpu_custom_call.1} parent=27 // pred_region
          %187 = dma.done %s180, 5120
        $region36: #{tpu_custom_call.1} parent=27 // pred_fallthru
          _
        %188 = sfence
        %p189 = pneg %p41
        %p190 = pneg %p38
        %s191 = sand.u32 %s54, 1
        %s192 = scalar_lea.sflag [#allocation3], %s191
        %s193 = sand.u32 %s54, 1
        %s194 = smul.addr %s193, 320
        %s195 = scalar_lea.vmem [#allocation6], %s194
        %p196 = pneg %p67
        %p197 = pneg %p64
        %p198 = pneg %p93
        %p199 = pneg %p90
        %s200 = sand.u32 %s80, 1
        %s201 = scalar_lea.sflag [#allocation4], %s200
        %s202 = sand.u32 %s80, 1
        %s203 = smul.addr %s202, 64
        %s204 = scalar_lea.vmem [#allocation7], %s203
        %p205 = pneg %p119
        %p206 = pneg %p116
        %s207 = sand.u32 %s106, 1
        %s208 = scalar_lea.sflag [#allocation9], %s207
        %s209 = sand.u32 %s106, 1
        %s210 = smul.addr %s209, 64
        %s211 = scalar_lea.vmem [#allocation8], %s210
        %v212 = vld [vmem:[%s183] sm:$0xff]
        %v213 = vld [vmem:[%s183 + $0x8] sm:$0xff]
        %v214 = vld [vmem:[%s183 + $0x10] sm:$0xff]
        %v215 = vld [vmem:[%s183 + $0x18] sm:$0xff]
        %v216 = vld [vmem:[%s183 + $0x20] sm:$0xff]
        %v217 = vld [vmem:[%s183 + $0x28] sm:$0xff]
        %v218 = vld [vmem:[%s183 + $0x30] sm:$0xff]
        %v219 = vld [vmem:[%s183 + $0x38] sm:$0xff]
        %s220 = scalar_lea.vmem %s183, 64 [#allocation6]
        %v221 = vld [vmem:[%s220] sm:$0xff]
        %v222 = vld [vmem:[%s220 + $0x8] sm:$0xff]
        %v223 = vld [vmem:[%s220 + $0x10] sm:$0xff]
        %v224 = vld [vmem:[%s220 + $0x18] sm:$0xff]
        %v225 = vld [vmem:[%s220 + $0x20] sm:$0xff]
        %v226 = vld [vmem:[%s220 + $0x28] sm:$0xff]
        %v227 = vld [vmem:[%s220 + $0x30] sm:$0xff]
        %v228 = vld [vmem:[%s220 + $0x38] sm:$0xff]
        %s229 = scalar_lea.vmem %s183, 128 [#allocation6]
        %v230 = vld [vmem:[%s229] sm:$0xff]
        %v231 = vld [vmem:[%s229 + $0x8] sm:$0xff]
        %v232 = vld [vmem:[%s229 + $0x10] sm:$0xff]
        %v233 = vld [vmem:[%s229 + $0x18] sm:$0xff]
        %v234 = vld [vmem:[%s229 + $0x20] sm:$0xff]
        %v235 = vld [vmem:[%s229 + $0x28] sm:$0xff]
        %v236 = vld [vmem:[%s229 + $0x30] sm:$0xff]
        %v237 = vld [vmem:[%s229 + $0x38] sm:$0xff]
        %s238 = scalar_lea.vmem %s183, 192 [#allocation6]
        %v239 = vld [vmem:[%s238] sm:$0xff]
        %v240 = vld [vmem:[%s238 + $0x8] sm:$0xff]
        %v241 = vld [vmem:[%s238 + $0x10] sm:$0xff]
        %v242 = vld [vmem:[%s238 + $0x18] sm:$0xff]
        %v243 = vld [vmem:[%s238 + $0x20] sm:$0xff]
        %v244 = vld [vmem:[%s238 + $0x28] sm:$0xff]
        %v245 = vld [vmem:[%s238 + $0x30] sm:$0xff]
        %v246 = vld [vmem:[%s238 + $0x38] sm:$0xff]
        %s247 = scalar_lea.vmem %s183, 256 [#allocation6]
        %v248 = vld [vmem:[%s247] sm:$0xff]
        %v249 = vld [vmem:[%s247 + $0x8] sm:$0xff]
        %v250 = vld [vmem:[%s247 + $0x10] sm:$0xff]
        %v251 = vld [vmem:[%s247 + $0x18] sm:$0xff]
        %v252 = vld [vmem:[%s247 + $0x20] sm:$0xff]
        %v253 = vld [vmem:[%s247 + $0x28] sm:$0xff]
        %v254 = vld [vmem:[%s247 + $0x30] sm:$0xff]
        %v255 = vld [vmem:[%s247 + $0x38] sm:$0xff]
        %s256 = sld [smem:[#allocation2]]
        %v257 = vstv %s256
        %v258 = vmul.f32 %v257, %v212
        %v259 = vmul.f32 %v257, %v213
        %v260 = vmul.f32 %v257, %v214
        %v261 = vmul.f32 %v257, %v215
        %v262 = vmul.f32 %v257, %v216
        %v263 = vmul.f32 %v257, %v217
        %v264 = vmul.f32 %v257, %v218
        %v265 = vmul.f32 %v257, %v219
        %s266 = sld [smem:[#allocation2 + $0x1]]
        %v267 = vstv %s266
        %v268 = vmul.f32 %v267, %v221
        %v269 = vmul.f32 %v267, %v222
        %v270 = vmul.f32 %v267, %v223
        %v271 = vmul.f32 %v267, %v224
        %v272 = vmul.f32 %v267, %v225
        %v273 = vmul.f32 %v267, %v226
        %v274 = vmul.f32 %v267, %v227
        %v275 = vmul.f32 %v267, %v228
        %v276 = vadd.f32 %v258, %v268
        %v277 = vadd.f32 %v259, %v269
        %v278 = vadd.f32 %v260, %v270
        %v279 = vadd.f32 %v261, %v271
        %v280 = vadd.f32 %v262, %v272
        %v281 = vadd.f32 %v263, %v273
        %v282 = vadd.f32 %v264, %v274
        %v283 = vadd.f32 %v265, %v275
        %s284 = sld [smem:[#allocation2 + $0x2]]
        %v285 = vstv %s284
        %v286 = vmul.f32 %v285, %v230
        %v287 = vmul.f32 %v285, %v231
        %v288 = vmul.f32 %v285, %v232
        %v289 = vmul.f32 %v285, %v233
        %v290 = vmul.f32 %v285, %v234
        %v291 = vmul.f32 %v285, %v235
        %v292 = vmul.f32 %v285, %v236
        %v293 = vmul.f32 %v285, %v237
        %v294 = vadd.f32 %v276, %v286
        %v295 = vadd.f32 %v277, %v287
        %v296 = vadd.f32 %v278, %v288
        %v297 = vadd.f32 %v279, %v289
        %v298 = vadd.f32 %v280, %v290
        %v299 = vadd.f32 %v281, %v291
        %v300 = vadd.f32 %v282, %v292
        %v301 = vadd.f32 %v283, %v293
        %s302 = sld [smem:[#allocation2 + $0x3]]
        %v303 = vstv %s302
        %v304 = vmul.f32 %v303, %v239
        %v305 = vmul.f32 %v303, %v240
        %v306 = vmul.f32 %v303, %v241
        %v307 = vmul.f32 %v303, %v242
        %v308 = vmul.f32 %v303, %v243
        %v309 = vmul.f32 %v303, %v244
        %v310 = vmul.f32 %v303, %v245
        %v311 = vmul.f32 %v303, %v246
        %v312 = vadd.f32 %v294, %v304
        %v313 = vadd.f32 %v295, %v305
        %v314 = vadd.f32 %v296, %v306
        %v315 = vadd.f32 %v297, %v307
        %v316 = vadd.f32 %v298, %v308
        %v317 = vadd.f32 %v299, %v309
        %v318 = vadd.f32 %v300, %v310
        %v319 = vadd.f32 %v301, %v311
        %s320 = sld [smem:[#allocation2 + $0x4]]
        %v321 = vstv %s320
        %v322 = vmul.f32 %v321, %v248
        %v323 = vmul.f32 %v321, %v249
        %v324 = vmul.f32 %v321, %v250
        %v325 = vmul.f32 %v321, %v251
        %v326 = vmul.f32 %v321, %v252
        %v327 = vmul.f32 %v321, %v253
        %v328 = vmul.f32 %v321, %v254
        %v329 = vmul.f32 %v321, %v255
        %v330 = vadd.f32 %v312, %v322
        %v331 = vadd.f32 %v313, %v323
        %v332 = vadd.f32 %v314, %v324
        %v333 = vadd.f32 %v315, %v325
        %v334 = vadd.f32 %v316, %v326
        %v335 = vadd.f32 %v317, %v327
        %v336 = vadd.f32 %v318, %v328
        %v337 = vadd.f32 %v319, %v329
        %s338 = sld [smem:[#allocation2 + $0x5]]
        %v339 = vstv %s338
        %v340 = vadd.f32 %v330, %v339
        %v341 = vadd.f32 %v331, %v339
        %v342 = vadd.f32 %v332, %v339
        %v343 = vadd.f32 %v333, %v339
        %v344 = vadd.f32 %v334, %v339
        %v345 = vadd.f32 %v335, %v339
        %v346 = vadd.f32 %v336, %v339
        %v347 = vadd.f32 %v337, %v339
        %348 = vst [vmem:[%s211] sm:$0xff] %v340
        %349 = vst [vmem:[%s211 + $0x8] sm:$0xff] %v341
        %350 = vst [vmem:[%s211 + $0x10] sm:$0xff] %v342
        %351 = vst [vmem:[%s211 + $0x18] sm:$0xff] %v343
        %352 = vst [vmem:[%s211 + $0x20] sm:$0xff] %v344
        %353 = vst [vmem:[%s211 + $0x28] sm:$0xff] %v345
        %354 = vst [vmem:[%s211 + $0x30] sm:$0xff] %v346
        %355 = vst [vmem:[%s211 + $0x38] sm:$0xff] %v347
        %v356 = vmul.f32 %v230, 10.0
        %v357 = vmul.f32 %v231, 10.0
        %v358 = vmul.f32 %v232, 10.0
        %v359 = vmul.f32 %v233, 10.0
        %v360 = vmul.f32 %v234, 10.0
        %v361 = vmul.f32 %v235, 10.0
        %v362 = vmul.f32 %v236, 10.0
        %v363 = vmul.f32 %v237, 10.0
        %v364 = vadd.f32 %v221, %v356
        %v365 = vadd.f32 %v222, %v357
        %v366 = vadd.f32 %v223, %v358
        %v367 = vadd.f32 %v224, %v359
        %v368 = vadd.f32 %v225, %v360
        %v369 = vadd.f32 %v226, %v361
        %v370 = vadd.f32 %v227, %v362
        %v371 = vadd.f32 %v228, %v363
        %s372 = sld [smem:[#allocation2 + $0x6]]
        %v373 = vstv %s372
        %vm374 = vcmp.gt.f32.partialorder %v364, %v373
        %vm375 = vcmp.gt.f32.partialorder %v365, %v373
        %vm376 = vcmp.gt.f32.partialorder %v366, %v373
        %vm377 = vcmp.gt.f32.partialorder %v367, %v373
        %vm378 = vcmp.gt.f32.partialorder %v368, %v373
        %vm379 = vcmp.gt.f32.partialorder %v369, %v373
        %vm380 = vcmp.gt.f32.partialorder %v370, %v373
        %vm381 = vcmp.gt.f32.partialorder %v371, %v373
        %vm382 = vcmp.ge.f32.partialorder %v230, 1.0
        %vm383 = vcmp.ge.f32.partialorder %v231, 1.0
        %vm384 = vcmp.ge.f32.partialorder %v232, 1.0
        %vm385 = vcmp.ge.f32.partialorder %v233, 1.0
        %vm386 = vcmp.ge.f32.partialorder %v234, 1.0
        %vm387 = vcmp.ge.f32.partialorder %v235, 1.0
        %vm388 = vcmp.ge.f32.partialorder %v236, 1.0
        %vm389 = vcmp.ge.f32.partialorder %v237, 1.0
        %vm390 = vmor %vm374, %vm382
        %vm391 = vmor %vm375, %vm383
        %vm392 = vmor %vm376, %vm384
        %vm393 = vmor %vm377, %vm385
        %vm394 = vmor %vm378, %vm386
        %vm395 = vmor %vm379, %vm387
        %vm396 = vmor %vm380, %vm388
        %vm397 = vmor %vm381, %vm389
        %v398 = vsel %vm390, -1e+10, %v340
        %v399 = vsel %vm391, -1e+10, %v341
        %v400 = vsel %vm392, -1e+10, %v342
        %v401 = vsel %vm393, -1e+10, %v343
        %v402 = vsel %vm394, -1e+10, %v344
        %v403 = vsel %vm395, -1e+10, %v345
        %v404 = vsel %vm396, -1e+10, %v346
        %v405 = vsel %vm397, -1e+10, %v347
        %v406 = vmax.f32 %v398, %v402
        %v407 = vmax.f32 %v399, %v403
        %v408 = vmax.f32 %v400, %v404
        %v409 = vmax.f32 %v401, %v405
        %v410 = vmax.f32 %v406, %v407
        %v411 = vmax.f32 %v408, %v409
        %v412 = vmax.f32 %v410, %v411
        %413 = vmax.xlane.f32.xlu0 %v412
        %v414 = vpop.xlane.xlu0 %413
        %v415 = vsub.f32 %v398, %v414
        %v416 = vsub.f32 %v399, %v414
        %v417 = vsub.f32 %v400, %v414
        %v418 = vsub.f32 %v401, %v414
        %v419 = vsub.f32 %v402, %v414
        %v420 = vsub.f32 %v403, %v414
        %v421 = vsub.f32 %v404, %v414
        %v422 = vsub.f32 %v405, %v414
        %v423 = vmul.f32 %v415, 1.442695
        %v424 = vpow.pop %v423
        %v425 = vmul.f32 %v416, 1.442695
        %v426 = vpow.pop %v425
        %v427 = vmul.f32 %v417, 1.442695
        %v428 = vpow.pop %v427
        %v429 = vmul.f32 %v418, 1.442695
        %v430 = vpow.pop %v429
        %v431 = vmul.f32 %v419, 1.442695
        %v432 = vpow.pop %v431
        %v433 = vmul.f32 %v420, 1.442695
        %v434 = vpow.pop %v433
        %v435 = vmul.f32 %v421, 1.442695
        %v436 = vpow.pop %v435
        %v437 = vmul.f32 %v422, 1.442695
        %v438 = vpow.pop %v437
        %v439 = vadd.f32 %v424, %v426
        %v440 = vadd.f32 %v439, %v428
        %v441 = vadd.f32 %v440, %v430
        %v442 = vadd.f32 %v441, %v432
        %v443 = vadd.f32 %v442, %v434
        %v444 = vadd.f32 %v443, %v436
        %v445 = vadd.f32 %v444, %v438
        %446 = vadd.xlane.f32.xlu0 %v445
        %v447 = vpop.xlane.xlu0 %446
        %v448 = vrcp.pop %v447
        %v449 = vmul.f32 %v424, %v448
        %v450 = vmul.f32 %v426, %v448
        %v451 = vmul.f32 %v428, %v448
        %v452 = vmul.f32 %v430, %v448
        %v453 = vmul.f32 %v432, %v448
        %v454 = vmul.f32 %v434, %v448
        %v455 = vmul.f32 %v436, %v448
        %v456 = vmul.f32 %v438, %v448
        %457 = vst [vmem:[%s204] sm:$0xff] %v449
        %458 = vst [vmem:[%s204 + $0x8] sm:$0xff] %v450
        %459 = vst [vmem:[%s204 + $0x10] sm:$0xff] %v451
        %460 = vst [vmem:[%s204 + $0x18] sm:$0xff] %v452
        %461 = vst [vmem:[%s204 + $0x20] sm:$0xff] %v453
        %462 = vst [vmem:[%s204 + $0x28] sm:$0xff] %v454
        %463 = vst [vmem:[%s204 + $0x30] sm:$0xff] %v455
        %464 = vst [vmem:[%s204 + $0x38] sm:$0xff] %v456
        %s465 = sand.u32 %s80, 1
        %s466 = scalar_lea.sflag [#allocation4], %s465
        %s467 = sand.u32 %s80, 1
        %s468 = smul.addr %s467, 64
        %s469 = scalar_lea.vmem [#allocation7], %s468
        %s470 = sand.u32 %s106, 1
        %s471 = scalar_lea.sflag [#allocation9], %s470
        %s472 = sand.u32 %s106, 1
        %s473 = smul.addr %s472, 64
        %s474 = scalar_lea.vmem [#allocation8], %s473
        // Predicated region
        $region37: #{tpu_custom_call.1} parent=27 // pred_check
          %p475 = pneg %p90
        $region38: #{tpu_custom_call.1} parent=27 // pred_check_branch
          %477 = sbr.rel (%p475) target = $region40
        $region39: #{tpu_custom_call.1} parent=27 // pred_region
          %s479 = ssub.s32 1024, 1024
          %480 = vsyncadd %s466, %s479
          %s481 = smul.addr %s25, 8
          %s482 = smul.addr %s481, 128
          %s483 = scalar_lea.hbm %s2, %s482
          %s485 = sshll.u32 %s469, 4
          %s486 = int_to_ptr.vmem [resolvable:$true] %s485
          %488 = dma.vmem_to_hbm [thread:$0]  %s486, 1024, %s483, %s466
        $region40: #{tpu_custom_call.1} parent=27 // pred_fallthru
          _
        // Predicated region
        $region41: #{tpu_custom_call.1} parent=27 // pred_check
          %p489 = pneg %p116
        $region42: #{tpu_custom_call.1} parent=27 // pred_check_branch
          %491 = sbr.rel (%p489) target = $region44
        $region43: #{tpu_custom_call.1} parent=27 // pred_region
          %s493 = ssub.s32 1024, 1024
          %494 = vsyncadd %s471, %s493
          %s495 = smul.addr %s25, 8
          %s496 = smul.addr %s495, 128
          %s497 = scalar_lea.hbm %s3, %s496
          %s499 = sshll.u32 %s474, 4
          %s500 = int_to_ptr.vmem [resolvable:$true] %s499
          %502 = dma.vmem_to_hbm [thread:$0]  %s500, 1024, %s497, %s471
        $region44: #{tpu_custom_call.1} parent=27 // pred_fallthru
          _
      $region28: #{tpu_custom_call.1} parent=5 // pred_fallthru
        _
      %p503 = scmp.le.s32.totalorder 2, %s20
      // Predicated region
      $region45: #{tpu_custom_call.1} parent=5 // pred_check
        %p504 = pneg %p503
      $region46: #{tpu_custom_call.1} parent=5 // pred_check_branch
        %506 = sbr.rel (%p504) target = $region48
      $region47: #{tpu_custom_call.1} parent=5 // pred_region
        %s507 = ssub.s32 %s20, 2
        // Predicated region
        $region49: #{tpu_custom_call.1} parent=47 // pred_check
          %p508 = pneg %p96
        $region50: #{tpu_custom_call.1} parent=47 // pred_check_branch
          %510 = sbr.rel (%p508) target = $region52
        $region51: #{tpu_custom_call.1} parent=47 // pred_region
          %s511 = sand.u32 %s81, 1
          %s512 = scalar_lea.sflag [#allocation4], %s511
          %s513 = sand.u32 %s81, 1
          %s514 = smul.addr %s513, 64
          %s515 = scalar_lea.vmem [#allocation7], %s514
          %516 = dma.done %s512, 1024
        $region52: #{tpu_custom_call.1} parent=47 // pred_fallthru
          _
        // Predicated region
        $region53: #{tpu_custom_call.1} parent=47 // pred_check
          %p517 = pneg %p122
        $region54: #{tpu_custom_call.1} parent=47 // pred_check_branch
          %519 = sbr.rel (%p517) target = $region56
        $region55: #{tpu_custom_call.1} parent=47 // pred_region
          %s520 = sand.u32 %s107, 1
          %s521 = scalar_lea.sflag [#allocation9], %s520
          %s522 = sand.u32 %s107, 1
          %s523 = smul.addr %s522, 64
          %s524 = scalar_lea.vmem [#allocation8], %s523
          %525 = dma.done %s521, 1024
        $region56: #{tpu_custom_call.1} parent=47 // pred_fallthru
          _
      $region48: #{tpu_custom_call.1} parent=5 // pred_fallthru
        _
    $region6: #{tpu_custom_call.1} parent=1 // loop_footer
      %s24 = sadd.s32 1, %s20
    $region7: #{tpu_custom_call.1} parent=1 // loop_footer_branch
      %19 = sbr.rel target = $region3
    $region8: #{tpu_custom_call.1} parent=1 // loop_exit
      _
    %526 = vsyncpa [#allocation3], 1
    %s527 = scalar_lea.sflag [#allocation3], 1
    %528 = vsyncpa %s527, 1
    %529 = vsyncpa [#allocation4], 1
    %s530 = scalar_lea.sflag [#allocation4], 1
    %531 = vsyncpa %s530, 1
    %532 = vsyncpa [#allocation9], 1
    %s533 = scalar_lea.sflag [#allocation9], 1
    %534 = vsyncpa %s533, 1
    %535 = vsyncpa [#allocation5], 1
    %s536 = scalar_lea.sflag [#allocation5], 1
    %537 = vsyncpa %s536, 1

</llo_original>
